<compile_context>
chip_gen: v7x
topology: tpu7x:2x2x1
jax: 0.10.0
libtpu: 0.0.40
codegen_flags: <defaults>
</compile_context>

<pallas_src>
import jax
import jax.numpy as jnp
from jax.experimental import pallas as pl
from jax.experimental.pallas import tpu as pltpu

_MIB = 1024 * 1024


def _round_up(x, m):
    return (x + m - 1) // m * m


def _round_down(x, m):
    return x // m * m


def _vmem_tile_bytes(rows, cols, itemsize):
    """Bytes a (rows, cols) buffer occupies in VMEM after (sublane,128) tiling."""
    sub = 8 * 4 // itemsize  # 8 rows for f32, 16 for bf16
    return _round_up(max(rows, 1), sub) * _round_up(max(cols, 1), 128) * itemsize


def _vmem_budget_bytes():
    """(physical cap, working-set budget, vmem_limit_bytes).

    v7x (64 MiB/TC)   -> ~24 MiB budget, 48 MiB limit
    v5e/v6e (128 MiB) -> ~48 MiB budget, 80 MiB limit
    """
    try:
        cap = int(pltpu.get_tpu_info().vmem_capacity_bytes)
    except Exception:
        cap = 64 * _MIB  # conservative (v7x-sized) fallback
    budget = (cap * 3) // 8
    limit = min(2 * budget, 80 * _MIB)
    return cap, budget, limit


# ----------------------------------------------------------------------------
# Kernels
# ----------------------------------------------------------------------------
def mbo_fused_kernel(x_ref, w_ref, b_ref, s_ref, o_ref):
    # x: [TB, Cin]   w: [Cin, NP]   b,s: [1, NP] f32   o: [TB, NP]
    acc = jnp.dot(x_ref[...], w_ref[...], preferred_element_type=jnp.float32)
    o_ref[...] = ((acc + b_ref[...]) * s_ref[...]).astype(o_ref.dtype)


def mbo_fused_kernel_ktiled(x_ref, w_ref, b_ref, s_ref, o_ref, acc_ref):
    # Streamed-K variant: x [TB, TK], w [TK, NP], f32 accumulator scratch.
    k = pl.program_id(1)

    @pl.when(k == 0)
    def _():
        acc_ref[...] = jnp.zeros_like(acc_ref)

    acc_ref[...] += jnp.dot(x_ref[...], w_ref[...],
                            preferred_element_type=jnp.float32)

    @pl.when(k == pl.num_programs(1) - 1)
    def _():
        o_ref[...] = ((acc_ref[...] + b_ref[...]) * s_ref[...]).astype(o_ref.dtype)


# ----------------------------------------------------------------------------
# One-time parameter preparation (do NOT run per forward call)
# ----------------------------------------------------------------------------
def prepare_params(params, weights_dtype=jnp.float32, out_dtype=jnp.float32,
                   pad_output_lanes=None):
    """Transpose, fuse both branches, optionally pad the output lanes.

    weights_dtype: resident fused-weight dtype (bf16 halves the resident
        footprint and weight-read bytes; works on v5e/v6e/v7x, f32 accumulate).
    out_dtype: dtype of the fused kernel output (bf16 halves HBM writeback).
    pad_output_lanes: None = auto -> pad to a 128 multiple only when
        2*num_classes >= 128; tiny class counts keep an un-padded 2*NC-wide
        output block to cut writeback bytes.
    """
    NC, Cin = params["w1"].shape
    two_nc = 2 * NC
    if pad_output_lanes is None:
        pad_output_lanes = two_nc >= 128
    NP = _round_up(two_nc, 128) if pad_output_lanes else two_nc
    pad = NP - two_nc

    w_cat = jnp.concatenate([params["w1"].T, params["w2"].T],
                            axis=1).astype(jnp.float32)
    if pad:
        w_cat = jnp.pad(w_cat, ((0, 0), (0, pad)))
    w_cat = w_cat.astype(weights_dtype)

    b_cat = jnp.concatenate([params["b1"], params["b2"]]).astype(jnp.float32)
    scale = jnp.concatenate(
        [params["wc"].astype(jnp.float32),
         jnp.broadcast_to(params["wA"].astype(jnp.float32), (NC,))])
    if pad:
        b_cat = jnp.pad(b_cat, (0, pad))
        scale = jnp.pad(scale, (0, pad))

    return {"w": w_cat, "b": b_cat.reshape(1, NP), "s": scale.reshape(1, NP),
            "NC": NC, "Cin": Cin, "NP": NP,
            "weights_dtype": jnp.dtype(weights_dtype),
            "out_dtype": jnp.dtype(out_dtype)}


# ----------------------------------------------------------------------------
# Tile selection ((8,128)-tiling-aware VMEM accounting)
# ----------------------------------------------------------------------------
def _choose_tb_resident(b_rows, cin, np_, x_isz, w_isz, out_isz, budget, sub):
    # Residents counted double-buffered (conservative even if Buffered(1) sticks).
    resident = 2 * (_vmem_tile_bytes(cin, np_, w_isz)
                    + 2 * _vmem_tile_bytes(1, np_, 4))
    per_row = 2 * (_round_up(cin, 128) * x_isz + _round_up(np_, 128) * out_isz)
    avail = budget - resident
    if avail < per_row * sub:
        tb = sub  # residents eat the budget; caller should have chosen the K path
    else:
        tb = min(avail // per_row, 1024, max(b_rows, sub))
        tb = max(sub, _round_down(int(tb), sub))
    return int(tb)


def _choose_tiles_ktiled(b_rows, cin, np_, x_isz, w_isz, out_isz, budget, sub):
    tk = 128
    for cand in (512, 384, 256, 128):
        if cin % cand == 0:
            tk = cand
            break
    resident = 2 * 2 * _vmem_tile_bytes(1, np_, 4)        # bias + scale (x2 buf)
    streamed_w = 2 * _vmem_tile_bytes(tk, np_, w_isz)      # double-buffered slabs
    per_row = (2 * (_round_up(tk, 128) * x_isz + _round_up(np_, 128) * out_isz)
               + _round_up(np_, 128) * 4)                  # + f32 acc scratch
    avail = budget - resident - streamed_w
    if avail < per_row * sub:
        tb = sub
    else:
        tb = min(avail // per_row, 1024, max(b_rows, sub))
        tb = max(sub, _round_down(int(tb), sub))
    return int(tb), int(tk)


# ----------------------------------------------------------------------------
# pallas_call builders
# ----------------------------------------------------------------------------
def _resident_kwargs(single_buffer):
    # Buffered(1): no double buffering for constant-index (grid-invariant) operands.
    return {"pipeline_mode": pl.Buffered(1)} if single_buffer else {}


def _cost(b_pad, cin, np_, x_isz, w_isz, out_isz):
    flops = 2 * b_pad * cin * np_
    bytes_accessed = (b_pad * cin * x_isz + cin * np_ * w_isz
                      + 2 * np_ * 4 + b_pad * np_ * out_isz)
    return pl.CostEstimate(flops=flops, transcendentals=0,
                           bytes_accessed=bytes_accessed)


def _call_resident(x_pad, w, b, s, tb, np_, out_dtype, vmem_limit, single_buffer):
    b_pad, cin = x_pad.shape
    res = _resident_kwargs(single_buffer)
    return pl.pallas_call(
        mbo_fused_kernel,
        out_shape=jax.ShapeDtypeStruct((b_pad, np_), out_dtype),
        grid=(b_pad // tb,),
        in_specs=[
            pl.BlockSpec((tb, cin), lambda i: (i, 0)),           # x: streamed
            pl.BlockSpec((cin, np_), lambda i: (0, 0), **res),   # weights: resident
            pl.BlockSpec((1, np_), lambda i: (0, 0), **res),     # fused bias
            pl.BlockSpec((1, np_), lambda i: (0, 0), **res),     # fused scale
        ],
        out_specs=pl.BlockSpec((tb, np_), lambda i: (i, 0)),
        compiler_params=pltpu.CompilerParams(
            dimension_semantics=("parallel",),
            vmem_limit_bytes=int(vmem_limit)),
        cost_estimate=_cost(b_pad, cin, np_, x_pad.dtype.itemsize,
                            w.dtype.itemsize, jnp.dtype(out_dtype).itemsize),
    )(x_pad, w, b, s)


def _call_ktiled(x_pad, w, b, s, tb, tk, np_, out_dtype, vmem_limit, single_buffer):
    b_pad, cin = x_pad.shape
    res = _resident_kwargs(single_buffer)
    return pl.pallas_call(
        mbo_fused_kernel_ktiled,
        out_shape=jax.ShapeDtypeStruct((b_pad, np_), out_dtype),
        grid=(b_pad // tb, cin // tk),
        in_specs=[
            pl.BlockSpec((tb, tk), lambda i, k: (i, k)),          # x tile
            pl.BlockSpec((tk, np_), lambda i, k: (k, 0)),         # weight K-slab
            pl.BlockSpec((1, np_), lambda i, k: (0, 0), **res),   # fused bias
            pl.BlockSpec((1, np_), lambda i, k: (0, 0), **res),   # fused scale
        ],
        out_specs=pl.BlockSpec((tb, np_), lambda i, k: (i, 0)),
        scratch_shapes=[pltpu.VMEM((tb, np_), jnp.float32)],
        compiler_params=pltpu.CompilerParams(
            dimension_semantics=("parallel", "arbitrary"),
            vmem_limit_bytes=int(vmem_limit)),
        cost_estimate=_cost(b_pad, cin, np_, x_pad.dtype.itemsize,
                            w.dtype.itemsize, jnp.dtype(out_dtype).itemsize),
    )(x_pad, w, b, s)


# ----------------------------------------------------------------------------
# Forward
# ----------------------------------------------------------------------------
_SINGLE_BUFFER_RESIDENTS_OK = True  # flipped off if pl.Buffered(1) is rejected


def mbo_forward(x, params, prepared, return_the_first_branch=True,
                materialize_branches=True, force_k_tiles=False):
    """MBOLayer forward.  x: [B, Cin]; `prepared` comes from prepare_params.

    x is never cast here (a wrapper-side cast costs an extra HBM round trip);
    feed bf16 x from the producer to get the full bf16 input path.

    materialize_branches=True  -> aux matches the PyTorch module exactly
        ('branch1'/'branch2' are [B, NC] copies).
    materialize_branches=False -> aux exposes the raw fused kernel buffer
        ('fused', [b_pad, NP]) plus 'num_classes'/'batch'; rows >= B and
        columns >= 2*NC of that buffer are padding garbage -- slice at the
        consumer that actually needs a branch.
    """
    global _SINGLE_BUFFER_RESIDENTS_OK
    B, Cin = x.shape
    assert Cin == prepared["Cin"], "x feature dim does not match prepared params"
    NC, NP = prepared["NC"], prepared["NP"]
    out_dtype = prepared["out_dtype"]
    w, bvec, svec = prepared["w"], prepared["b"], prepared["s"]

    x_isz = jnp.dtype(x.dtype).itemsize
    w_isz = w.dtype.itemsize
    out_isz = jnp.dtype(out_dtype).itemsize
    cap, budget, vmem_limit = _vmem_budget_bytes()

    sub = 16 if (x_isz == 2 or out_isz == 2) else 8
    b_pad0 = _round_up(B, sub)

    # Resident weights vs streamed-K path.
    resident_w = 2 * _vmem_tile_bytes(Cin, NP, w_isz)
    use_k = force_k_tiles or resident_w > budget // 2
    if use_k and Cin % 128 != 0:
        # TODO(synk): pad Cin to a 128 multiple (weights once + x per call) to
        # enable the streamed-K path for ragged feature widths.
        use_k = False

    if use_k:
        tb, tk = _choose_tiles_ktiled(b_pad0, Cin, NP, x_isz, w_isz, out_isz,
                                      budget, sub)
    else:
        tb = _choose_tb_resident(b_pad0, Cin, NP, x_isz, w_isz, out_isz,
                                 budget, sub)
        tk = Cin
        need = resident_w + 4 * _MIB
        if need > vmem_limit:  # guard: don't let big residents trip the limit
            vmem_limit = min(_round_up(need, _MIB), (cap * 7) // 8)

    # v7x megacore: guarantee >= 2 batch grid steps when the batch allows, so
    # dimension_semantics=("parallel", ...) splits work across both TCs.
    if b_pad0 >= 2 * sub:
        tb = min(tb, _round_down(b_pad0 // 2, sub))
    tb = max(sub, tb)

    # Bound batch-padding waste to roughly one sublane-rounded tile.
    b_pad = _round_up(B, tb)
    if b_pad - B > max(B // 8, sub):
        n_tiles = -(-B // tb)
        tb = _round_up(-(-B // n_tiles), sub)
        b_pad = _round_up(B, tb)

    x_pad = x if b_pad == B else jnp.pad(x, ((0, b_pad - B), (0, 0)))

    def _run(single_buffer):
        if use_k:
            return _call_ktiled(x_pad, w, bvec, svec, tb, tk, NP, out_dtype,
                                vmem_limit, single_buffer)
        return _call_resident(x_pad, w, bvec, svec, tb, NP, out_dtype,
                              vmem_limit, single_buffer)

    if _SINGLE_BUFFER_RESIDENTS_OK:
        try:
            o_fused = _run(True)
        except Exception:
            # pl.Buffered(1) on the grid-invariant residents not supported by
            # this jax/Mosaic build -> fall back to default double buffering.
            _SINGLE_BUFFER_RESIDENTS_OK = False
            o_fused = _run(False)
    else:
        o_fused = _run(False)

    aux = {"wc": params["wc"], "wA": params["wA"],
           "alpha": params["alpha"], "beta": params["beta"]}
    if materialize_branches:
        aux["branch1"] = o_fused[:B, :NC]
        aux["branch2"] = o_fused[:B, NC:2 * NC]
        out = aux["branch1"] if return_the_first_branch else aux["branch2"]
    else:
        aux["fused"] = o_fused        # padding rows/cols are garbage (see doc)
        aux["num_classes"] = NC
        aux["batch"] = B
        off = 0 if return_the_first_branch else NC
        out = o_fused[:B, off:off + NC]
    return out, aux


# ----------------------------------------------------------------------------
# Parameter init (matches nn.Linear default init + MBOLayer extras)
# ----------------------------------------------------------------------------
def init_params(key, in_channels, num_classes, w_c, w_A):
    k1, k2, k3, k4, k5, k6 = jax.random.split(key, 6)
    bound = 1.0 / jnp.sqrt(in_channels)
    return {
        "w1": jax.random.uniform(k1, (num_classes, in_channels),
                                 minval=-bound, maxval=bound, dtype=jnp.float32),
        "b1": jax.random.uniform(k2, (num_classes,),
                                 minval=-bound, maxval=bound, dtype=jnp.float32),
        "w2": jax.random.uniform(k3, (num_classes, in_channels),
                                 minval=-bound, maxval=bound, dtype=jnp.float32),
        "b2": jax.random.uniform(k4, (num_classes,),
                                 minval=-bound, maxval=bound, dtype=jnp.float32),
        "wc": jnp.asarray(w_c, dtype=jnp.float32),
        "wA": jnp.asarray([w_A], dtype=jnp.float32),
        "alpha": jax.random.uniform(k5, (1,), dtype=jnp.float32) * 5.0,
        "beta": jax.random.uniform(k6, (1,), dtype=jnp.float32) * 5.0,
    }


if __name__ == "__main__":
    key = jax.random.PRNGKey(0)

    def reference(xv, p):
        hp = jax.lax.Precision.HIGHEST
        o1 = (jnp.dot(xv, p["w1"].T, precision=hp) + p["b1"]) * p["wc"]
        o2 = (jnp.dot(xv, p["w2"].T, precision=hp) + p["b2"]) * p["wA"]
        return o1, o2

    # ---- Test 1: small shapes, f32 everywhere (strict correctness) ----------
    batch, in_channels, num_classes = 2, 32, 8
    kx, kp, key = jax.random.split(key, 3)
    x = jax.random.normal(kx, (batch, in_channels), dtype=jnp.float32)
    w_c = [0.5 + 0.1 * i for i in range(num_classes)]
    params = init_params(kp, in_channels, num_classes, w_c, 1.5)

    prep = prepare_params(params)  # f32 weights / f32 out, un-padded 2*NC output
    out, aux = mbo_forward(x, params, prep, return_the_first_branch=True)
    jax.block_until_ready(out)
    jax.block_until_ready(aux["branch2"])

    o1_ref, o2_ref = reference(x, params)
    assert out.shape == (batch, num_classes)
    assert jnp.allclose(out, o1_ref, atol=2e-5), "branch1 mismatch (f32)"
    assert jnp.allclose(aux["branch2"], o2_ref, atol=2e-5), "branch2 mismatch (f32)"

    # Perf path: fused aux buffer, no branch slice copies in the wrapper.
    out2, aux2 = mbo_forward(x, params, prep, return_the_first_branch=False,
                             materialize_branches=False)
    jax.block_until_ready(out2)
    assert jnp.allclose(out2, o2_ref, atol=2e-5), "branch2 (fused aux) mismatch"
    assert aux2["fused"].shape[1] == prep["NP"]

    # ---- Test 2: bf16 producer path (bf16 x, bf16 resident weights, bf16 out)
    prep_bf16 = prepare_params(params, weights_dtype=jnp.bfloat16,
                               out_dtype=jnp.bfloat16)
    x_bf16 = x.astype(jnp.bfloat16)            # produced upstream in bf16
    out_bf, aux_bf = mbo_forward(x_bf16, params, prep_bf16)
    jax.block_until_ready(out_bf)
    assert jnp.allclose(out_bf.astype(jnp.float32), o1_ref, atol=5e-2), \
        "branch1 mismatch (bf16)"
    assert jnp.allclose(aux_bf["branch2"].astype(jnp.float32), o2_ref, atol=5e-2), \
        "branch2 mismatch (bf16)"

    # ---- Test 3: streamed-K path (large-Cin escape hatch), f32 --------------
    batch3, cin3, nc3 = 64, 1024, 8
    kx3, kp3, key = jax.random.split(key, 3)
    x3 = jax.random.normal(kx3, (batch3, cin3), dtype=jnp.float32)
    params3 = init_params(kp3, cin3, nc3, [1.0] * nc3, 0.75)
    prep3 = prepare_params(params3)
    out3, aux3 = mbo_forward(x3, params3, prep3, force_k_tiles=True)
    jax.block_until_ready(out3)
    o1_ref3, o2_ref3 = reference(x3, params3)
    assert jnp.allclose(out3, o1_ref3, atol=5e-3, rtol=1e-3), \
        "branch1 mismatch (K-tiled)"
    assert jnp.allclose(aux3["branch2"], o2_ref3, atol=5e-3, rtol=1e-3), \
        "branch2 mismatch (K-tiled)"

    print("KERNEL_OK")
</pallas_src>

<mosaic_0001>
module attributes {stable_mosaic.version = 11 : i64} {
  func.func @mbo_fused_kernel(%arg0: i32, %arg1: memref<8x32xf32, #tpu.memory_space<vmem>>, %arg2: memref<32x16xf32, #tpu.memory_space<vmem>>, %arg3: memref<1x16xf32, #tpu.memory_space<vmem>>, %arg4: memref<1x16xf32, #tpu.memory_space<vmem>>, %arg5: memref<8x16xf32, #tpu.memory_space<vmem>>) attributes {dimension_semantics = [#tpu.dimension_semantics<parallel>], iteration_bounds = array<i64: 1>, scalar_prefetch = 0 : i64, scratch_operands = 0 : i64, tpu.core_type = #tpu.core_type<tc>, window_params = [{transform_indices = @transform_0, window_bounds = array<i64: 8, 32>}, {pipeline_mode = #tpu.pipeline_mode<synchronous>, transform_indices = @transform_1, window_bounds = array<i64: 32, 16>}, {pipeline_mode = #tpu.pipeline_mode<synchronous>, transform_indices = @transform_2, window_bounds = array<i64: 1, 16>}, {pipeline_mode = #tpu.pipeline_mode<synchronous>, transform_indices = @transform_3, window_bounds = array<i64: 1, 16>}, {transform_indices = @transform_4, window_bounds = array<i64: 8, 16>}]} {
    %c0 = arith.constant 0 : index
    %c0_0 = arith.constant 0 : index
    %0 = vector.load %arg1[%c0, %c0_0] : memref<8x32xf32, #tpu.memory_space<vmem>>, vector<8x32xf32>
    %c0_1 = arith.constant 0 : index
    %c0_2 = arith.constant 0 : index
    %1 = vector.load %arg2[%c0_1, %c0_2] : memref<32x16xf32, #tpu.memory_space<vmem>>, vector<32x16xf32>
    %cst = arith.constant dense<0.000000e+00> : vector<8x16xf32>
    %2 = tpu.matmul %0, %1, %cst {dimension_numbers = #tpu.dot_dimension_numbers<[1], [0], [0], [1], [0, 0, 1, 1], [], []>} : vector<8x32xf32>, vector<32x16xf32>, vector<8x16xf32> -> vector<8x16xf32>
    %c0_3 = arith.constant 0 : index
    %c0_4 = arith.constant 0 : index
    %3 = vector.load %arg3[%c0_3, %c0_4] : memref<1x16xf32, #tpu.memory_space<vmem>>, vector<1x16xf32>
    %4 = vector.broadcast %3 : vector<1x16xf32> to vector<8x16xf32>
    %5 = arith.addf %2, %4 : vector<8x16xf32>
    %c0_5 = arith.constant 0 : index
    %c0_6 = arith.constant 0 : index
    %6 = vector.load %arg4[%c0_5, %c0_6] : memref<1x16xf32, #tpu.memory_space<vmem>>, vector<1x16xf32>
    %7 = vector.broadcast %6 : vector<1x16xf32> to vector<8x16xf32>
    %8 = arith.mulf %5, %7 : vector<8x16xf32>
    %c0_7 = arith.constant 0 : index
    %c0_8 = arith.constant 0 : index
    %9 = vector.load %arg5[%c0_7, %c0_8] : memref<8x16xf32, #tpu.memory_space<vmem>>, vector<8x16xf32>
    tpu.vector_store %arg5[%c0_7, %c0_8], %8 {strides = array<i32>} : memref<8x16xf32, #tpu.memory_space<vmem>>, vector<8x16xf32>,
    return
  }
  func.func @transform_0(%arg0: i32) -> (i32, i32) {
    %c0_i32 = arith.constant 0 : i32
    %c0_i32_0 = arith.constant 0 : i32
    return %arg0, %c0_i32 : i32, i32
  }
  func.func @transform_1(%arg0: i32) -> (i32, i32) {
    %c0_i32 = arith.constant 0 : i32
    %c0_i32_0 = arith.constant 0 : i32
    %c0_i32_1 = arith.constant 0 : i32
    return %c0_i32, %c0_i32_0 : i32, i32
  }
  func.func @transform_2(%arg0: i32) -> (i32, i32) {
    %c0_i32 = arith.constant 0 : i32
    %c0_i32_0 = arith.constant 0 : i32
    %c0_i32_1 = arith.constant 0 : i32
    return %c0_i32, %c0_i32_0 : i32, i32
  }
  func.func @transform_3(%arg0: i32) -> (i32, i32) {
    %c0_i32 = arith.constant 0 : i32
    %c0_i32_0 = arith.constant 0 : i32
    %c0_i32_1 = arith.constant 0 : i32
    return %c0_i32, %c0_i32_0 : i32, i32
  }
  func.func @transform_4(%arg0: i32) -> (i32, i32) {
    %c0_i32 = arith.constant 0 : i32
    %c0_i32_0 = arith.constant 0 : i32
    return %arg0, %c0_i32 : i32, i32
  }
}

module attributes {stable_mosaic.version = 11 : i64} {
  func.func @mbo_fused_kernel(%arg0: i32, %arg1: memref<8x32xf32, #tpu.memory_space<vmem>>, %arg2: memref<32x16xf32, #tpu.memory_space<vmem>>, %arg3: memref<1x16xf32, #tpu.memory_space<vmem>>, %arg4: memref<1x16xf32, #tpu.memory_space<vmem>>, %arg5: memref<8x16xf32, #tpu.memory_space<vmem>>) attributes {dimension_semantics = [#tpu.dimension_semantics<parallel>], iteration_bounds = array<i64: 1>, scalar_prefetch = 0 : i64, scratch_operands = 0 : i64, tpu.core_type = #tpu.core_type<tc>, window_params = [{transform_indices = @transform_0, window_bounds = array<i64: 8, 32>}, {pipeline_mode = #tpu.pipeline_mode<synchronous>, transform_indices = @transform_1, window_bounds = array<i64: 32, 16>}, {pipeline_mode = #tpu.pipeline_mode<synchronous>, transform_indices = @transform_2, window_bounds = array<i64: 1, 16>}, {pipeline_mode = #tpu.pipeline_mode<synchronous>, transform_indices = @transform_3, window_bounds = array<i64: 1, 16>}, {transform_indices = @transform_4, window_bounds = array<i64: 8, 16>}]} {
    %c0 = arith.constant 0 : index
    %c0_0 = arith.constant 0 : index
    %0 = vector.load %arg1[%c0, %c0_0] : memref<8x32xf32, #tpu.memory_space<vmem>>, vector<8x32xf32>
    %c0_1 = arith.constant 0 : index
    %c0_2 = arith.constant 0 : index
    %1 = vector.load %arg2[%c0_1, %c0_2] : memref<32x16xf32, #tpu.memory_space<vmem>>, vector<32x16xf32>
    %cst = arith.constant dense<0.000000e+00> : vector<8x16xf32>
    %2 = tpu.matmul %0, %1, %cst {dimension_numbers = #tpu.dot_dimension_numbers<[1], [0], [0], [1], [0, 0, 1, 1], [], []>} : vector<8x32xf32>, vector<32x16xf32>, vector<8x16xf32> -> vector<8x16xf32>
    %c0_3 = arith.constant 0 : index
    %c0_4 = arith.constant 0 : index
    %3 = vector.load %arg3[%c0_3, %c0_4] : memref<1x16xf32, #tpu.memory_space<vmem>>, vector<1x16xf32>
    %4 = vector.broadcast %3 : vector<1x16xf32> to vector<8x16xf32>
    %5 = arith.addf %2, %4 : vector<8x16xf32>
    %c0_5 = arith.constant 0 : index
    %c0_6 = arith.constant 0 : index
    %6 = vector.load %arg4[%c0_5, %c0_6] : memref<1x16xf32, #tpu.memory_space<vmem>>, vector<1x16xf32>
    %7 = vector.broadcast %6 : vector<1x16xf32> to vector<8x16xf32>
    %8 = arith.mulf %5, %7 : vector<8x16xf32>
    %c0_7 = arith.constant 0 : index
    %c0_8 = arith.constant 0 : index
    %9 = vector.load %arg5[%c0_7, %c0_8] : memref<8x16xf32, #tpu.memory_space<vmem>>, vector<8x16xf32>
    tpu.vector_store %arg5[%c0_7, %c0_8], %8 {strides = array<i32>} : memref<8x16xf32, #tpu.memory_space<vmem>>, vector<8x16xf32>,
    return
  }
  func.func @transform_0(%arg0: i32) -> (i32, i32) {
    %c0_i32 = arith.constant 0 : i32
    %c0_i32_0 = arith.constant 0 : i32
    return %arg0, %c0_i32 : i32, i32
  }
  func.func @transform_1(%arg0: i32) -> (i32, i32) {
    %c0_i32 = arith.constant 0 : i32
    %c0_i32_0 = arith.constant 0 : i32
    %c0_i32_1 = arith.constant 0 : i32
    return %c0_i32, %c0_i32_0 : i32, i32
  }
  func.func @transform_2(%arg0: i32) -> (i32, i32) {
    %c0_i32 = arith.constant 0 : i32
    %c0_i32_0 = arith.constant 0 : i32
    %c0_i32_1 = arith.constant 0 : i32
    return %c0_i32, %c0_i32_0 : i32, i32
  }
  func.func @transform_3(%arg0: i32) -> (i32, i32) {
    %c0_i32 = arith.constant 0 : i32
    %c0_i32_0 = arith.constant 0 : i32
    %c0_i32_1 = arith.constant 0 : i32
    return %c0_i32, %c0_i32_0 : i32, i32
  }
  func.func @transform_4(%arg0: i32) -> (i32, i32) {
    %c0_i32 = arith.constant 0 : i32
    %c0_i32_0 = arith.constant 0 : i32
    return %arg0, %c0_i32 : i32, i32
  }
}

</mosaic_0001>

<llo_original>
// kernel: tpu_custom_call.1
$region0: #{tpu_custom_call.1}
  #allocation0 [shape = 'u32[]', space=smem, size = 0x4, offset = 0x4, fixed_abs, tag = 'smem constant byte address 0x4 - core index']
  #allocation1 [shape = 'u32[144,128]{1,0:T(1,128)}', space=vmem, size = 0x12000, scoped, tag = 'internal scratch']
  %s0 = inlined_call_operand.vmem [shape: f32[8,32], index: 0, kind: input, shape index: {}]
  %s1 = inlined_call_operand.vmem [shape: f32[32,16], index: 1, kind: input, shape index: {}]
  %s2 = inlined_call_operand.vmem [shape: f32[1,16], index: 2, kind: input, shape index: {}]
  %s3 = inlined_call_operand.vmem [shape: f32[1,16], index: 3, kind: input, shape index: {}]
  %s4 = inlined_call_operand.hbm [shape: f32[8,16], index: 4, kind: output, shape index: {}]
  %s5 = sld [smem:[#allocation0]]
  $region26: #{tpu_custom_call.1} parent=0
    _
  %s7 = ssub.s32 1, %s5
  %s8 = scalar_select 0, %s7, %s5
  $region1: #{tpu_custom_call.1} parent=0
    #allocation2 [shape = 'u8[4096]{0}', space=vmem, size = 0x1000, scoped, tag = 'output window, operand 0, single buffered']
    #allocation3 [shape = 's32[1]{0}', space=sflag, size = 0x4, scoped, tag = 'scoped memory for tpu_custom_call.1']
    %9 = vsyncpa [#allocation3], 0
    // Predicated region
    $region2: #{tpu_custom_call.1} parent=1 // pred_check
      _
    $region3: #{tpu_custom_call.1} parent=1 // pred_check_branch
      %11 = sbr.rel (0) target = $region5
    $region4: #{tpu_custom_call.1} parent=1 // pred_region
      _
    $region5: #{tpu_custom_call.1} parent=1 // pred_fallthru
      _
    // Predicated region
    $region6: #{tpu_custom_call.1} parent=1 // pred_check
      _
    $region7: #{tpu_custom_call.1} parent=1 // pred_check_branch
      %13 = sbr.rel (0) target = $region9
    $region8: #{tpu_custom_call.1} parent=1 // pred_region
      _
    $region9: #{tpu_custom_call.1} parent=1 // pred_fallthru
      _
    // Predicated region
    $region10: #{tpu_custom_call.1} parent=1 // pred_check
      _
    $region11: #{tpu_custom_call.1} parent=1 // pred_check_branch
      %15 = sbr.rel (0) target = $region13
    $region12: #{tpu_custom_call.1} parent=1 // pred_region
      _
    $region13: #{tpu_custom_call.1} parent=1 // pred_fallthru
      _
    // Predicated region
    $region14: #{tpu_custom_call.1} parent=1 // pred_check
      _
    $region15: #{tpu_custom_call.1} parent=1 // pred_check_branch
      %17 = sbr.rel (0) target = $region17
    $region16: #{tpu_custom_call.1} parent=1 // pred_region
      _
    $region17: #{tpu_custom_call.1} parent=1 // pred_fallthru
      _
    %v18 = vld [vmem:[%s0] sm:$0xff]
    %v19 = vld [vmem:[%s1] sm:$0xff]
    %v20 = vld [vmem:[%s1 + $0x8] sm:$0xff]
    %v21 = vld [vmem:[%s1 + $0x10] sm:$0xff]
    %v22 = vld [vmem:[%s1 + $0x18] sm:$0xff]
    %v23 = vld [vmem:[%s2] sm:$0x1]
    %v25 = vlaneseq
    %v26 = vshrl.u32 %v25, 7
    %v27 = vsub.s32 0, %v26
    %v28 = vrot.slane %v23, %v27
    %vm30 = vcmask 261120
    %v32 = vsel %vm30, %v18, 0
    %34 = vmatprep.subr.mxu0 0.0
    %35 = vmatpush1.msra.mxu0 %v19
    %36 = vmatprep.subr.mxu0 0.0
    %37 = vmatpush1.msra.mxu0 %v20
    %38 = vmatprep.subr.mxu0 0.0
    %39 = vmatpush1.msra.mxu0 %v21
    %40 = vmatprep.subr.mxu0 0.0
    %41 = vmatpush1.msra.mxu0 %v22
    %42 = vmatprep.subr.mxu0 0.0
    %43 = vmatpush1.msra.mxu0 0.0
    %44 = vmatprep.subr.mxu0 0.0
    %45 = vmatpush1.msra.mxu0 0.0
    %46 = vmatprep.subr.mxu0 0.0
    %47 = vmatpush1.msra.mxu0 0.0
    %48 = vmatprep.subr.mxu0 0.0
    %49 = vmatpush1.msra.mxu0 0.0
    %50 = vmatprep.subr.mxu0 0.0
    %51 = vmatpush1.msra.mxu0 0.0
    %52 = vmatprep.subr.mxu0 0.0
    %53 = vmatpush1.msra.mxu0 0.0
    %54 = vmatprep.subr.mxu0 0.0
    %55 = vmatpush1.msra.mxu0 0.0
    %56 = vmatprep.subr.mxu0 0.0
    %57 = vmatpush1.msra.mxu0 0.0
    %58 = vmatprep.subr.mxu0 0.0
    %59 = vmatpush1.msra.mxu0 0.0
    %60 = vmatprep.subr.mxu0 0.0
    %61 = vmatpush1.msra.mxu0 0.0
    %62 = vmatprep.subr.mxu0 0.0
    %63 = vmatpush1.msra.mxu0 0.0
    %64 = vmatprep.subr.mxu0 0.0
    %65 = vmatpush1.msra.mxu0 0.0
    %66 = vmatprep.subr.mxu0 0.0
    %67 = vmatpush1.msra.mxu0 0.0
    %68 = vmatprep.subr.mxu0 0.0
    %69 = vmatpush1.msra.mxu0 0.0
    %70 = vmatprep.subr.mxu0 0.0
    %71 = vmatpush1.msra.mxu0 0.0
    %72 = vmatprep.subr.mxu0 0.0
    %73 = vmatpush1.msra.mxu0 0.0
    %74 = vmatprep.subr.mxu0 0.0
    %75 = vmatpush1.msra.mxu0 0.0
    %76 = vmatprep.subr.mxu0 0.0
    %77 = vmatpush1.msra.mxu0 0.0
    %78 = vmatprep.subr.mxu0 0.0
    %79 = vmatpush1.msra.mxu0 0.0
    %80 = vmatprep.subr.mxu0 0.0
    %81 = vmatpush1.msra.mxu0 0.0
    %82 = vmatprep.subr.mxu0 0.0
    %83 = vmatpush1.msra.mxu0 0.0
    %84 = vmatprep.subr.mxu0 0.0
    %85 = vmatpush1.msra.mxu0 0.0
    %86 = vmatprep.subr.mxu0 0.0
    %87 = vmatpush1.msra.mxu0 0.0
    %88 = vmatprep.subr.mxu0 0.0
    %89 = vmatpush1.msra.mxu0 0.0
    %90 = vmatprep.subr.mxu0 0.0
    %91 = vmatpush1.msra.mxu0 0.0
    %92 = vmatprep.subr.mxu0 0.0
    %93 = vmatpush1.msra.mxu0 0.0
    %94 = vmatprep.subr.mxu0 0.0
    %95 = vmatpush1.msra.mxu0 0.0
    %96 = vmatprep.subr.mxu0 0.0
    %97 = vmatpush1.msra.mxu0 0.0
    %98 = vmatprep.mubr.f32.mxu0 0.0
    %99 = vmatmul.mubr.f32.gmra.mrb[0].mxu0 %v32
    %v100 = vpop.f32.mrb[0].mxu0
    %v101 = vadd.f32 %v28, %v100
    %v102 = vpop.f32.mrb[0].mxu0
    %103 = vdwg.mxu0
    %v104 = vld [vmem:[%s3] sm:$0x1]
    %v106 = vlaneseq
    %v107 = vshrl.u32 %v106, 7
    %v108 = vsub.s32 0, %v107
    %v109 = vrot.slane %v104, %v108
    %v111 = vmul.f32 %v101, %v109
    %vm112 = vcmask 130048
    %113 = vst.msk [vmem:[#allocation2] sm:$0xff] %vm112, %v111
    // Predicated region
    $region18: #{tpu_custom_call.1} parent=1 // pred_check
      _
    $region19: #{tpu_custom_call.1} parent=1 // pred_check_branch
      %115 = sbr.rel (0) target = $region21
    $region20: #{tpu_custom_call.1} parent=1 // pred_region
      %s117 = ssub.s32 128, 128
      %118 = vsyncadd [#allocation3], %s117
      %s120 = sshll.u32 [#allocation2], 4
      %s121 = int_to_ptr.vmem [resolvable:$true] %s120
      %123 = dma.vmem_to_hbm [thread:$0]  %s121, 128, %s4, [#allocation3]
    $region21: #{tpu_custom_call.1} parent=1 // pred_fallthru
      _
    // Predicated region
    $region22: #{tpu_custom_call.1} parent=1 // pred_check
      _
    $region23: #{tpu_custom_call.1} parent=1 // pred_check_branch
      %125 = sbr.rel (0) target = $region25
    $region24: #{tpu_custom_call.1} parent=1 // pred_region
      %126 = dma.done [#allocation3], 128
    $region25: #{tpu_custom_call.1} parent=1 // pred_fallthru
      _
    %127 = vsyncpa [#allocation3], 1

// kernel: tpu_custom_call.1
$region0: #{tpu_custom_call.1}
  #allocation0 [shape = 'u32[]', space=smem, size = 0x4, offset = 0x4, fixed_abs, tag = 'smem constant byte address 0x4 - core index']
  #allocation1 [shape = 'u32[144,128]{1,0:T(1,128)}', space=vmem, size = 0x12000, scoped, tag = 'internal scratch']
  %s0 = inlined_call_operand.vmem [shape: f32[8,32], index: 0, kind: input, shape index: {}]
  %s1 = inlined_call_operand.vmem [shape: f32[32,16], index: 1, kind: input, shape index: {}]
  %s2 = inlined_call_operand.vmem [shape: f32[1,16], index: 2, kind: input, shape index: {}]
  %s3 = inlined_call_operand.vmem [shape: f32[1,16], index: 3, kind: input, shape index: {}]
  %s4 = inlined_call_operand.hbm [shape: f32[8,16], index: 4, kind: output, shape index: {}]
  %s5 = sld [smem:[#allocation0]]
  $region26: #{tpu_custom_call.1} parent=0
    _
  %s7 = ssub.s32 1, %s5
  %s8 = scalar_select 0, %s7, %s5
  $region1: #{tpu_custom_call.1} parent=0
    #allocation2 [shape = 'u8[4096]{0}', space=vmem, size = 0x1000, scoped, tag = 'output window, operand 0, single buffered']
    #allocation3 [shape = 's32[1]{0}', space=sflag, size = 0x4, scoped, tag = 'scoped memory for tpu_custom_call.1']
    %9 = vsyncpa [#allocation3], 0
    // Predicated region
    $region2: #{tpu_custom_call.1} parent=1 // pred_check
      _
    $region3: #{tpu_custom_call.1} parent=1 // pred_check_branch
      %11 = sbr.rel (0) target = $region5
    $region4: #{tpu_custom_call.1} parent=1 // pred_region
      _
    $region5: #{tpu_custom_call.1} parent=1 // pred_fallthru
      _
    // Predicated region
    $region6: #{tpu_custom_call.1} parent=1 // pred_check
      _
    $region7: #{tpu_custom_call.1} parent=1 // pred_check_branch
      %13 = sbr.rel (0) target = $region9
    $region8: #{tpu_custom_call.1} parent=1 // pred_region
      _
    $region9: #{tpu_custom_call.1} parent=1 // pred_fallthru
      _
    // Predicated region
    $region10: #{tpu_custom_call.1} parent=1 // pred_check
      _
    $region11: #{tpu_custom_call.1} parent=1 // pred_check_branch
      %15 = sbr.rel (0) target = $region13
    $region12: #{tpu_custom_call.1} parent=1 // pred_region
      _
    $region13: #{tpu_custom_call.1} parent=1 // pred_fallthru
      _
    // Predicated region
    $region14: #{tpu_custom_call.1} parent=1 // pred_check
      _
    $region15: #{tpu_custom_call.1} parent=1 // pred_check_branch
      %17 = sbr.rel (0) target = $region17
    $region16: #{tpu_custom_call.1} parent=1 // pred_region
      _
    $region17: #{tpu_custom_call.1} parent=1 // pred_fallthru
      _
    %v18 = vld [vmem:[%s0] sm:$0xff]
    %v19 = vld [vmem:[%s1] sm:$0xff]
    %v20 = vld [vmem:[%s1 + $0x8] sm:$0xff]
    %v21 = vld [vmem:[%s1 + $0x10] sm:$0xff]
    %v22 = vld [vmem:[%s1 + $0x18] sm:$0xff]
    %v23 = vld [vmem:[%s2] sm:$0x1]
    %v25 = vlaneseq
    %v26 = vshrl.u32 %v25, 7
    %v27 = vsub.s32 0, %v26
    %v28 = vrot.slane %v23, %v27
    %vm30 = vcmask 261120
    %v32 = vsel %vm30, %v18, 0
    %34 = vmatprep.subr.mxu0 0.0
    %35 = vmatpush1.msra.mxu0 %v19
    %36 = vmatprep.subr.mxu0 0.0
    %37 = vmatpush1.msra.mxu0 %v20
    %38 = vmatprep.subr.mxu0 0.0
    %39 = vmatpush1.msra.mxu0 %v21
    %40 = vmatprep.subr.mxu0 0.0
    %41 = vmatpush1.msra.mxu0 %v22
    %42 = vmatprep.subr.mxu0 0.0
    %43 = vmatpush1.msra.mxu0 0.0
    %44 = vmatprep.subr.mxu0 0.0
    %45 = vmatpush1.msra.mxu0 0.0
    %46 = vmatprep.subr.mxu0 0.0
    %47 = vmatpush1.msra.mxu0 0.0
    %48 = vmatprep.subr.mxu0 0.0
    %49 = vmatpush1.msra.mxu0 0.0
    %50 = vmatprep.subr.mxu0 0.0
    %51 = vmatpush1.msra.mxu0 0.0
    %52 = vmatprep.subr.mxu0 0.0
    %53 = vmatpush1.msra.mxu0 0.0
    %54 = vmatprep.subr.mxu0 0.0
    %55 = vmatpush1.msra.mxu0 0.0
    %56 = vmatprep.subr.mxu0 0.0
    %57 = vmatpush1.msra.mxu0 0.0
    %58 = vmatprep.subr.mxu0 0.0
    %59 = vmatpush1.msra.mxu0 0.0
    %60 = vmatprep.subr.mxu0 0.0
    %61 = vmatpush1.msra.mxu0 0.0
    %62 = vmatprep.subr.mxu0 0.0
    %63 = vmatpush1.msra.mxu0 0.0
    %64 = vmatprep.subr.mxu0 0.0
    %65 = vmatpush1.msra.mxu0 0.0
    %66 = vmatprep.subr.mxu0 0.0
    %67 = vmatpush1.msra.mxu0 0.0
    %68 = vmatprep.subr.mxu0 0.0
    %69 = vmatpush1.msra.mxu0 0.0
    %70 = vmatprep.subr.mxu0 0.0
    %71 = vmatpush1.msra.mxu0 0.0
    %72 = vmatprep.subr.mxu0 0.0
    %73 = vmatpush1.msra.mxu0 0.0
    %74 = vmatprep.subr.mxu0 0.0
    %75 = vmatpush1.msra.mxu0 0.0
    %76 = vmatprep.subr.mxu0 0.0
    %77 = vmatpush1.msra.mxu0 0.0
    %78 = vmatprep.subr.mxu0 0.0
    %79 = vmatpush1.msra.mxu0 0.0
    %80 = vmatprep.subr.mxu0 0.0
    %81 = vmatpush1.msra.mxu0 0.0
    %82 = vmatprep.subr.mxu0 0.0
    %83 = vmatpush1.msra.mxu0 0.0
    %84 = vmatprep.subr.mxu0 0.0
    %85 = vmatpush1.msra.mxu0 0.0
    %86 = vmatprep.subr.mxu0 0.0
    %87 = vmatpush1.msra.mxu0 0.0
    %88 = vmatprep.subr.mxu0 0.0
    %89 = vmatpush1.msra.mxu0 0.0
    %90 = vmatprep.subr.mxu0 0.0
    %91 = vmatpush1.msra.mxu0 0.0
    %92 = vmatprep.subr.mxu0 0.0
    %93 = vmatpush1.msra.mxu0 0.0
    %94 = vmatprep.subr.mxu0 0.0
    %95 = vmatpush1.msra.mxu0 0.0
    %96 = vmatprep.subr.mxu0 0.0
    %97 = vmatpush1.msra.mxu0 0.0
    %98 = vmatprep.mubr.f32.mxu0 0.0
    %99 = vmatmul.mubr.f32.gmra.mrb[0].mxu0 %v32
    %v100 = vpop.f32.mrb[0].mxu0
    %v101 = vadd.f32 %v28, %v100
    %v102 = vpop.f32.mrb[0].mxu0
    %103 = vdwg.mxu0
    %v104 = vld [vmem:[%s3] sm:$0x1]
    %v106 = vlaneseq
    %v107 = vshrl.u32 %v106, 7
    %v108 = vsub.s32 0, %v107
    %v109 = vrot.slane %v104, %v108
    %v111 = vmul.f32 %v101, %v109
    %vm112 = vcmask 130048
    %113 = vst.msk [vmem:[#allocation2] sm:$0xff] %vm112, %v111
    // Predicated region
    $region18: #{tpu_custom_call.1} parent=1 // pred_check
      _
    $region19: #{tpu_custom_call.1} parent=1 // pred_check_branch
      %115 = sbr.rel (0) target = $region21
    $region20: #{tpu_custom_call.1} parent=1 // pred_region
      %s117 = ssub.s32 128, 128
      %118 = vsyncadd [#allocation3], %s117
      %s120 = sshll.u32 [#allocation2], 4
      %s121 = int_to_ptr.vmem [resolvable:$true] %s120
      %123 = dma.vmem_to_hbm [thread:$0]  %s121, 128, %s4, [#allocation3]
    $region21: #{tpu_custom_call.1} parent=1 // pred_fallthru
      _
    // Predicated region
    $region22: #{tpu_custom_call.1} parent=1 // pred_check
      _
    $region23: #{tpu_custom_call.1} parent=1 // pred_check_branch
      %125 = sbr.rel (0) target = $region25
    $region24: #{tpu_custom_call.1} parent=1 // pred_region
      %126 = dma.done [#allocation3], 128
    $region25: #{tpu_custom_call.1} parent=1 // pred_fallthru
      _
    %127 = vsyncpa [#allocation3], 1

</llo_original>
